<compile_context>
chip_gen: v7x
topology: tpu7x:2x2x1
jax: 0.10.0
libtpu: 0.0.40
codegen_flags: <defaults>
</compile_context>

<pallas_src>
import jax
import jax.numpy as jnp
from jax.experimental import pallas as pl
from jax.experimental.pallas import tpu as pltpu


# --------------------------------------------------------------------------
# Helpers
# --------------------------------------------------------------------------
def _round_up(n, m):
    return ((n + m - 1) // m) * m


def _pad2(a, rows, cols):
    r, c = a.shape
    if (r, c) == (rows, cols):
        return a
    return jnp.pad(a, ((0, rows - r), (0, cols - c)))


def _pick_tile(dim, max_tile, granule):
    """Largest multiple of `granule` that divides `dim` and is <= max_tile.

    `dim` must already be a multiple of `granule`.  Choosing a divisor (rather
    than rounding the dim up to the tile) avoids inflating MXU/DMA work.
    """
    n = dim // granule
    best = 1
    for d in range(1, n + 1):
        if n % d == 0 and d * granule <= max_tile:
            best = d
    return best * granule


def _vmem_budget_bytes():
    """Per-generation VMEM budget (v5e/v6e: 128 MiB, v7x: 64 MiB physical)."""
    try:
        cap = pltpu.get_tpu_info().vmem_capacity_bytes
    except Exception:
        cap = 64 * 1024 * 1024  # conservative fallback (v7x physical)
    # Leave headroom for compiler-internal scratch / spills.
    return int(cap * 0.7)


# --------------------------------------------------------------------------
# Fused whole-encoder kernel (small/medium shapes; the production case)
# --------------------------------------------------------------------------
def _make_fused_kernel(n_layers):
    def kernel(*refs):
        x_ref = refs[0]
        o_ref = refs[-1]
        params = refs[1:-1]  # (w0, b0, w1, b1, ...)
        h = x_ref[...]
        for l in range(n_layers):
            w_ref = params[2 * l]
            b_ref = params[2 * l + 1]
            # MXU matmul in the weights' dtype, f32 accumulation.
            y = jnp.dot(h.astype(w_ref.dtype), w_ref[...],
                        preferred_element_type=jnp.float32)
            # Fused bias + ReLU epilogue on the VPU; intermediate stays on-chip.
            h = jnp.maximum(y + b_ref[...].astype(jnp.float32), 0.0)
        o_ref[...] = h.astype(o_ref.dtype)
    return kernel


def _fused_encoder(xp, wps, bps, *, out_dtype, tm_max=512):
    """Whole encoder in one pallas_call.  All inputs pre-padded (8 / 128)."""
    Mp, Kp0 = xp.shape
    Np_last = wps[-1].shape[1]
    n_layers = len(wps)

    tm = _pick_tile(Mp, tm_max, 8)
    grid = (Mp // tm,)

    in_specs = [pl.BlockSpec((tm, Kp0), lambda i: (i, 0))]
    for wp, bp in zip(wps, bps):
        # Full weight / bias resident in VMEM for every batch tile.
        in_specs.append(pl.BlockSpec(wp.shape, lambda i: (0, 0)))
        in_specs.append(pl.BlockSpec(bp.shape, lambda i: (0, 0)))

    flops = sum(2 * Mp * wp.shape[0] * wp.shape[1] for wp in wps)
    bytes_accessed = (
        xp.size * xp.dtype.itemsize
        + sum(w.size * w.dtype.itemsize for w in wps)
        + sum(b.size * b.dtype.itemsize for b in bps)
        + Mp * Np_last * jnp.dtype(out_dtype).itemsize)

    return pl.pallas_call(
        _make_fused_kernel(n_layers),
        out_shape=jax.ShapeDtypeStruct((Mp, Np_last), out_dtype),
        grid=grid,
        in_specs=in_specs,
        out_specs=pl.BlockSpec((tm, Np_last), lambda i: (i, 0)),
        compiler_params=pltpu.CompilerParams(
            dimension_semantics=("parallel",),
            vmem_limit_bytes=_vmem_budget_bytes()),
        cost_estimate=pl.CostEstimate(
            flops=flops, transcendentals=0, bytes_accessed=bytes_accessed),
    )(xp, *[p for pair in zip(wps, bps) for p in pair])


# --------------------------------------------------------------------------
# Tiled single-layer kernel (large-shape fallback)
# --------------------------------------------------------------------------
def _linear_relu_tiled_kernel(x_ref, w_ref, b_ref, o_ref):
    """One (tm, tn) tile of relu(x @ w + b).  o_ref (f32) doubles as the
    K-accumulator: its block index ignores k, so it stays VMEM-resident."""
    k = pl.program_id(2)

    @pl.when(k == 0)
    def _():
        o_ref[...] = jnp.zeros_like(o_ref)

    o_ref[...] += jnp.dot(x_ref[...].astype(w_ref.dtype), w_ref[...],
                          preferred_element_type=jnp.float32)

    @pl.when(k == pl.num_programs(2) - 1)
    def _():
        o_ref[...] = jnp.maximum(o_ref[...] + b_ref[...].astype(jnp.float32),
                                 0.0)


def _linear_relu_padded(xp, wp, bp, *, tm_max=512, tn_max=512, tk_max=1024):
    """relu(xp @ wp + bp) with pre-padded xp:(Mp,Kp), wp:(Kp,Np), bp:(1,Np).
    Mp % 8 == 0, Kp % 128 == 0, Np % 128 == 0.  Output is f32."""
    Mp, Kp = xp.shape
    Kp2, Np = wp.shape
    assert Kp == Kp2 and bp.shape == (1, Np)

    tm = _pick_tile(Mp, tm_max, 8)
    tn = _pick_tile(Np, tn_max, 128)
    tk = _pick_tile(Kp, tk_max, 128)

    budget = _vmem_budget_bytes()

    def usage(tm, tn, tk):
        in_b = xp.dtype.itemsize
        w_b = wp.dtype.itemsize
        # double-buffered inputs + double-buffered f32 output (= accumulator)
        return 2 * (tm * tk * in_b + tk * tn * w_b + tn * 4) + 2 * tm * tn * 4

    while usage(tm, tn, tk) > budget and tk > 128:
        tk = _pick_tile(Kp, tk // 2, 128)
    while usage(tm, tn, tk) > budget and tn > 128:
        tn = _pick_tile(Np, tn // 2, 128)
    while usage(tm, tn, tk) > budget and tm > 8:
        tm = _pick_tile(Mp, tm // 2, 8)

    grid = (Mp // tm, Np // tn, Kp // tk)

    cost = pl.CostEstimate(
        flops=2 * Mp * Kp * Np,
        transcendentals=0,
        bytes_accessed=(Mp * Kp * xp.dtype.itemsize * (Np // tn)   # x re-streamed per N tile
                        + Kp * Np * wp.dtype.itemsize * (Mp // tm)  # w re-streamed per M tile
                        + Np * 4 + Mp * Np * 4))

    return pl.pallas_call(
        _linear_relu_tiled_kernel,
        out_shape=jax.ShapeDtypeStruct((Mp, Np), jnp.float32),
        grid=grid,
        in_specs=[
            pl.BlockSpec((tm, tk), lambda i, j, k: (i, k)),
            pl.BlockSpec((tk, tn), lambda i, j, k: (k, j)),
            pl.BlockSpec((1, tn), lambda i, j, k: (0, j)),
        ],
        out_specs=pl.BlockSpec((tm, tn), lambda i, j, k: (i, j)),
        compiler_params=pltpu.CompilerParams(
            dimension_semantics=("parallel", "parallel", "arbitrary"),
            vmem_limit_bytes=budget),
        cost_estimate=cost,
    )(xp, wp, bp)


# --------------------------------------------------------------------------
# Public forward pass
# --------------------------------------------------------------------------
def advanced_image_encoder(image_features, weights_t, biases, *,
                           compute_dtype=None,
                           fused_weight_vmem_limit=8 * 1024 * 1024):
    """Forward pass of AdvancedImageEncoder: repeated Linear + ReLU.

    weights_t[l] is the l-th layer weight pre-transposed to (D_in, D_out);
    biases[l] is (D_out,).  compute_dtype (e.g. jnp.bfloat16 on v6e/v7x)
    optionally narrows the MXU inputs; accumulation/output stay f32.
    """
    x = image_features
    M, K0 = x.shape
    out_dtype = x.dtype
    assert weights_t[0].shape[0] == K0

    if compute_dtype is not None:
        # Opt-in narrow compute; note this changes numerics vs the f32 ref.
        x = x.astype(compute_dtype)
        weights_t = [w.astype(compute_dtype) for w in weights_t]

    # Padded extents: sublane (8) on batch, lane (128) on feature dims.
    Mp = _round_up(M, 8)
    Kp = [_round_up(w.shape[0], 128) for w in weights_t]
    Np = [_round_up(w.shape[1], 128) for w in weights_t]

    # Pad parameters ONCE; activations stay padded across layers.
    wps = [_pad2(w, kp, np_) for w, kp, np_ in zip(weights_t, Kp, Np)]
    bps = [jnp.pad(b, (0, np_ - b.shape[0])).astype(jnp.float32).reshape(1, np_)
           for b, np_ in zip(biases, Np)]
    xp = _pad2(x, Mp, Kp[0])

    weight_bytes = (sum(w.size * w.dtype.itemsize for w in wps)
                    + sum(b.size * b.dtype.itemsize for b in bps))

    if weight_bytes <= fused_weight_vmem_limit:
        # Single pallas_call for the whole encoder (the production-shape path).
        out_p = _fused_encoder(xp, wps, bps, out_dtype=out_dtype)
    else:
        # Large-shape fallback: one tiled Linear+ReLU kernel per layer, chained
        # in the padded representation (no intermediate slicing/re-padding).
        h = xp
        for wp, bp in zip(wps, bps):
            h = _linear_relu_padded(h, wp, bp)
        out_p = h.astype(out_dtype)

    N_last = weights_t[-1].shape[1]
    return out_p[:M, :N_last]


# --------------------------------------------------------------------------
# Example / self-check
# --------------------------------------------------------------------------
if __name__ == "__main__":
    # Small shapes consistent with the module: batch=2, image_input_dim=32,
    # image_hidden_dim=32, image_layers=2.
    B, image_input_dim, image_hidden_dim, image_layers = 2, 32, 32, 2

    key = jax.random.PRNGKey(0)
    keys = jax.random.split(key, 2 * image_layers + 1)
    k_x, layer_keys = keys[0], keys[1:]

    # Deterministic parameter init mimicking nn.Linear's default:
    # U(-1/sqrt(in_features), 1/sqrt(in_features)), weight stored as (out, in).
    weights, biases = [], []
    in_dim = image_input_dim
    for i in range(image_layers):
        bound = 1.0 / (in_dim ** 0.5)
        kw, kb = layer_keys[2 * i], layer_keys[2 * i + 1]
        w = jax.random.uniform(
            kw, (image_hidden_dim, in_dim),
            minval=-bound, maxval=bound, dtype=jnp.float32)
        b = jax.random.uniform(
            kb, (image_hidden_dim,),
            minval=-bound, maxval=bound, dtype=jnp.float32)
        weights.append(w)
        biases.append(b)
        in_dim = image_hidden_dim

    image_features = jax.random.normal(
        k_x, (B, image_input_dim), dtype=jnp.float32)

    # Pre-transpose weights to (D_in, D_out) once, outside the forward pass.
    weights_t = [w.T for w in weights]

    # Pure-JAX reference (same semantics as the PyTorch module).
    ref = image_features
    for w, b in zip(weights, biases):
        ref = jnp.maximum(ref @ w.T + b, 0.0)

    # 1) Fused single-kernel path (the default at this shape).
    out = advanced_image_encoder(image_features, weights_t, biases)
    out = jax.block_until_ready(out)
    assert out.shape == (B, image_hidden_dim)
    assert jnp.allclose(out, ref, atol=1e-5, rtol=1e-5)

    # 2) Tiled fallback path (forced), to verify both code paths agree.
    out_tiled = advanced_image_encoder(
        image_features, weights_t, biases, fused_weight_vmem_limit=0)
    out_tiled = jax.block_until_ready(out_tiled)
    assert out_tiled.shape == (B, image_hidden_dim)
    assert jnp.allclose(out_tiled, ref, atol=1e-5, rtol=1e-5)

    print("KERNEL_OK")
</pallas_src>

<mosaic_0001>
module attributes {stable_mosaic.version = 11 : i64} {
  func.func @kernel(%arg0: i32, %arg1: memref<8x128xf32, #tpu.memory_space<vmem>>, %arg2: memref<128x128xf32, #tpu.memory_space<vmem>>, %arg3: memref<1x128xf32, #tpu.memory_space<vmem>>, %arg4: memref<128x128xf32, #tpu.memory_space<vmem>>, %arg5: memref<1x128xf32, #tpu.memory_space<vmem>>, %arg6: memref<8x128xf32, #tpu.memory_space<vmem>>) attributes {dimension_semantics = [#tpu.dimension_semantics<parallel>], iteration_bounds = array<i64: 1>, scalar_prefetch = 0 : i64, scratch_operands = 0 : i64, tpu.core_type = #tpu.core_type<tc>, window_params = [{transform_indices = @transform_0, window_bounds = array<i64: 8, 128>}, {pipeline_mode = #tpu.pipeline_mode<synchronous>, transform_indices = @transform_1, window_bounds = array<i64: 128, 128>}, {pipeline_mode = #tpu.pipeline_mode<synchronous>, transform_indices = @transform_2, window_bounds = array<i64: 1, 128>}, {pipeline_mode = #tpu.pipeline_mode<synchronous>, transform_indices = @transform_3, window_bounds = array<i64: 128, 128>}, {pipeline_mode = #tpu.pipeline_mode<synchronous>, transform_indices = @transform_4, window_bounds = array<i64: 1, 128>}, {transform_indices = @transform_5, window_bounds = array<i64: 8, 128>}]} {
    %c0 = arith.constant 0 : index
    %c0_0 = arith.constant 0 : index
    %0 = vector.load %arg1[%c0, %c0_0] : memref<8x128xf32, #tpu.memory_space<vmem>>, vector<8x128xf32>
    %c0_1 = arith.constant 0 : index
    %c0_2 = arith.constant 0 : index
    %1 = vector.load %arg2[%c0_1, %c0_2] : memref<128x128xf32, #tpu.memory_space<vmem>>, vector<128x128xf32>
    %cst = arith.constant dense<0.000000e+00> : vector<8x128xf32>
    %2 = tpu.matmul %0, %1, %cst {dimension_numbers = #tpu.dot_dimension_numbers<[1], [0], [0], [1], [0, 0, 1, 1], [], []>} : vector<8x128xf32>, vector<128x128xf32>, vector<8x128xf32> -> vector<8x128xf32>
    %c0_3 = arith.constant 0 : index
    %c0_4 = arith.constant 0 : index
    %3 = vector.load %arg3[%c0_3, %c0_4] : memref<1x128xf32, #tpu.memory_space<vmem>>, vector<1x128xf32>
    %4 = vector.broadcast %3 : vector<1x128xf32> to vector<8x128xf32>
    %5 = arith.addf %2, %4 : vector<8x128xf32>
    %cst_5 = arith.constant 0.000000e+00 : f32
    %6 = vector.broadcast %cst_5 : f32 to vector<8x128xf32>
    %7 = arith.maximumf %5, %6 : vector<8x128xf32>
    %c0_6 = arith.constant 0 : index
    %c0_7 = arith.constant 0 : index
    %8 = vector.load %arg4[%c0_6, %c0_7] : memref<128x128xf32, #tpu.memory_space<vmem>>, vector<128x128xf32>
    %cst_8 = arith.constant dense<0.000000e+00> : vector<8x128xf32>
    %9 = tpu.matmul %7, %8, %cst_8 {dimension_numbers = #tpu.dot_dimension_numbers<[1], [0], [0], [1], [0, 0, 1, 1], [], []>} : vector<8x128xf32>, vector<128x128xf32>, vector<8x128xf32> -> vector<8x128xf32>
    %c0_9 = arith.constant 0 : index
    %c0_10 = arith.constant 0 : index
    %10 = vector.load %arg5[%c0_9, %c0_10] : memref<1x128xf32, #tpu.memory_space<vmem>>, vector<1x128xf32>
    %11 = vector.broadcast %10 : vector<1x128xf32> to vector<8x128xf32>
    %12 = arith.addf %9, %11 : vector<8x128xf32>
    %cst_11 = arith.constant 0.000000e+00 : f32
    %13 = vector.broadcast %cst_11 : f32 to vector<8x128xf32>
    %14 = arith.maximumf %12, %13 : vector<8x128xf32>
    %c0_12 = arith.constant 0 : index
    %c0_13 = arith.constant 0 : index
    %15 = vector.load %arg6[%c0_12, %c0_13] : memref<8x128xf32, #tpu.memory_space<vmem>>, vector<8x128xf32>
    tpu.vector_store %arg6[%c0_12, %c0_13], %14 {strides = array<i32>} : memref<8x128xf32, #tpu.memory_space<vmem>>, vector<8x128xf32>,
    return
  }
  func.func @transform_0(%arg0: i32) -> (i32, i32) {
    %c0_i32 = arith.constant 0 : i32
    %c0_i32_0 = arith.constant 0 : i32
    return %arg0, %c0_i32 : i32, i32
  }
  func.func @transform_1(%arg0: i32) -> (i32, i32) {
    %c0_i32 = arith.constant 0 : i32
    %c0_i32_0 = arith.constant 0 : i32
    %c0_i32_1 = arith.constant 0 : i32
    return %c0_i32, %c0_i32_0 : i32, i32
  }
  func.func @transform_2(%arg0: i32) -> (i32, i32) {
    %c0_i32 = arith.constant 0 : i32
    %c0_i32_0 = arith.constant 0 : i32
    %c0_i32_1 = arith.constant 0 : i32
    return %c0_i32, %c0_i32_0 : i32, i32
  }
  func.func @transform_3(%arg0: i32) -> (i32, i32) {
    %c0_i32 = arith.constant 0 : i32
    %c0_i32_0 = arith.constant 0 : i32
    %c0_i32_1 = arith.constant 0 : i32
    return %c0_i32, %c0_i32_0 : i32, i32
  }
  func.func @transform_4(%arg0: i32) -> (i32, i32) {
    %c0_i32 = arith.constant 0 : i32
    %c0_i32_0 = arith.constant 0 : i32
    %c0_i32_1 = arith.constant 0 : i32
    return %c0_i32, %c0_i32_0 : i32, i32
  }
  func.func @transform_5(%arg0: i32) -> (i32, i32) {
    %c0_i32 = arith.constant 0 : i32
    %c0_i32_0 = arith.constant 0 : i32
    return %arg0, %c0_i32 : i32, i32
  }
}

</mosaic_0001>

<llo_original>
// kernel: tpu_custom_call.1
$region0: #{tpu_custom_call.1}
  #allocation0 [shape = 'u32[]', space=smem, size = 0x4, offset = 0x4, fixed_abs, tag = 'smem constant byte address 0x4 - core index']
  #allocation1 [shape = 'u32[144,128]{1,0:T(1,128)}', space=vmem, size = 0x12000, scoped, tag = 'internal scratch']
  %s0 = inlined_call_operand.hbm [shape: f32[8,128], index: 0, kind: input, shape index: {}]
  %s1 = inlined_call_operand.hbm [shape: f32[128,128], index: 1, kind: input, shape index: {}]
  %s2 = inlined_call_operand.vmem [shape: f32[1,128], index: 2, kind: input, shape index: {}]
  %s3 = inlined_call_operand.hbm [shape: f32[128,128], index: 3, kind: input, shape index: {}]
  %s4 = inlined_call_operand.vmem [shape: f32[1,128], index: 4, kind: input, shape index: {}]
  %s5 = inlined_call_operand.hbm [shape: f32[8,128], index: 5, kind: output, shape index: {}]
  %s6 = sld [smem:[#allocation0]]
  $region42: #{tpu_custom_call.1} parent=0
    _
  %s8 = ssub.s32 1, %s6
  %s9 = scalar_select 0, %s8, %s6
  $region1: #{tpu_custom_call.1} parent=0
    #allocation2 [shape = 'u8[4096]{0}', space=vmem, size = 0x1000, scoped, tag = 'input window, operand 0, single buffered']
    #allocation3 [shape = 's32[1]{0}', space=sflag, size = 0x4, scoped, tag = 'scoped memory for tpu_custom_call.1']
    #allocation4 [shape = 's32[1]{0}', space=sflag, size = 0x4, scoped, tag = 'scoped memory for tpu_custom_call.1']
    #allocation5 [shape = 'u8[65536]{0}', space=vmem, size = 0x10000, scoped, tag = 'input window, operand 1, single buffered']
    #allocation6 [shape = 's32[1]{0}', space=sflag, size = 0x4, scoped, tag = 'scoped memory for tpu_custom_call.1']
    #allocation7 [shape = 'u8[65536]{0}', space=vmem, size = 0x10000, scoped, tag = 'input window, operand 3, single buffered']
    #allocation8 [shape = 'u8[4096]{0}', space=vmem, size = 0x1000, scoped, tag = 'output window, operand 0, single buffered']
    %10 = vsyncpa [#allocation3], 0
    %11 = vsyncpa [#allocation6], 0
    %12 = vsyncpa [#allocation4], 0
    // Predicated region
    $region2: #{tpu_custom_call.1} parent=1 // pred_check
      _
    $region3: #{tpu_custom_call.1} parent=1 // pred_check_branch
      %14 = sbr.rel (0) target = $region5
    $region4: #{tpu_custom_call.1} parent=1 // pred_region
      %s16 = ssub.s32 128, 128
      %17 = vsyncadd [#allocation3], %s16
      %s19 = sshll.u32 [#allocation2], 4
      %s20 = int_to_ptr.vmem [resolvable:$true] %s19
      %22 = dma.hbm_to_vmem [thread:$0]  %s0, 128, %s20, [#allocation3]
    $region5: #{tpu_custom_call.1} parent=1 // pred_fallthru
      _
    // Predicated region
    $region6: #{tpu_custom_call.1} parent=1 // pred_check
      _
    $region7: #{tpu_custom_call.1} parent=1 // pred_check_branch
      %24 = sbr.rel (0) target = $region9
    $region8: #{tpu_custom_call.1} parent=1 // pred_region
      %s26 = ssub.s32 2048, 2048
      %27 = vsyncadd [#allocation6], %s26
      %s28 = sshll.u32 [#allocation5], 4
      %s29 = int_to_ptr.vmem [resolvable:$true] %s28
      %34 = dma.hbm_to_vmem [thread:$0]  %s1, 2048, %s29, [#allocation6], 128, 128, 8
    $region9: #{tpu_custom_call.1} parent=1 // pred_fallthru
      _
    // Predicated region
    $region10: #{tpu_custom_call.1} parent=1 // pred_check
      _
    $region11: #{tpu_custom_call.1} parent=1 // pred_check_branch
      %36 = sbr.rel (0) target = $region13
    $region12: #{tpu_custom_call.1} parent=1 // pred_region
      _
    $region13: #{tpu_custom_call.1} parent=1 // pred_fallthru
      _
    // Predicated region
    $region14: #{tpu_custom_call.1} parent=1 // pred_check
      _
    $region15: #{tpu_custom_call.1} parent=1 // pred_check_branch
      %38 = sbr.rel (0) target = $region17
    $region16: #{tpu_custom_call.1} parent=1 // pred_region
      %s40 = ssub.s32 2048, 2048
      %41 = vsyncadd [#allocation6], %s40
      %s42 = sshll.u32 [#allocation7], 4
      %s43 = int_to_ptr.vmem [resolvable:$true] %s42
      %48 = dma.hbm_to_vmem [thread:$0]  %s3, 2048, %s43, [#allocation6], 128, 128, 8
    $region17: #{tpu_custom_call.1} parent=1 // pred_fallthru
      _
    // Predicated region
    $region18: #{tpu_custom_call.1} parent=1 // pred_check
      _
    $region19: #{tpu_custom_call.1} parent=1 // pred_check_branch
      %50 = sbr.rel (0) target = $region21
    $region20: #{tpu_custom_call.1} parent=1 // pred_region
      _
    $region21: #{tpu_custom_call.1} parent=1 // pred_fallthru
      _
    // Predicated region
    $region22: #{tpu_custom_call.1} parent=1 // pred_check
      _
    $region23: #{tpu_custom_call.1} parent=1 // pred_check_branch
      %52 = sbr.rel (0) target = $region25
    $region24: #{tpu_custom_call.1} parent=1 // pred_region
      %53 = dma.done [#allocation3], 128
    $region25: #{tpu_custom_call.1} parent=1 // pred_fallthru
      _
    // Predicated region
    $region26: #{tpu_custom_call.1} parent=1 // pred_check
      _
    $region27: #{tpu_custom_call.1} parent=1 // pred_check_branch
      %55 = sbr.rel (0) target = $region29
    $region28: #{tpu_custom_call.1} parent=1 // pred_region
      %56 = dma.done [#allocation6], 2048
    $region29: #{tpu_custom_call.1} parent=1 // pred_fallthru
      _
    // Predicated region
    $region30: #{tpu_custom_call.1} parent=1 // pred_check
      _
    $region31: #{tpu_custom_call.1} parent=1 // pred_check_branch
      %58 = sbr.rel (0) target = $region33
    $region32: #{tpu_custom_call.1} parent=1 // pred_region
      %59 = dma.done [#allocation6], 2048
    $region33: #{tpu_custom_call.1} parent=1 // pred_fallthru
      _
    %v60 = vld [vmem:[#allocation2] sm:$0xff]
    %v61 = vld [vmem:[#allocation5] sm:$0xff]
    %v62 = vld [vmem:[#allocation5 + $0x8] sm:$0xff]
    %v63 = vld [vmem:[#allocation5 + $0x10] sm:$0xff]
    %v64 = vld [vmem:[#allocation5 + $0x18] sm:$0xff]
    %v65 = vld [vmem:[#allocation5 + $0x20] sm:$0xff]
    %v66 = vld [vmem:[#allocation5 + $0x28] sm:$0xff]
    %v67 = vld [vmem:[#allocation5 + $0x30] sm:$0xff]
    %v68 = vld [vmem:[#allocation5 + $0x38] sm:$0xff]
    %v69 = vld [vmem:[#allocation5 + $0x40] sm:$0xff]
    %v70 = vld [vmem:[#allocation5 + $0x48] sm:$0xff]
    %v71 = vld [vmem:[#allocation5 + $0x50] sm:$0xff]
    %v72 = vld [vmem:[#allocation5 + $0x58] sm:$0xff]
    %v73 = vld [vmem:[#allocation5 + $0x60] sm:$0xff]
    %v74 = vld [vmem:[#allocation5 + $0x68] sm:$0xff]
    %v75 = vld [vmem:[#allocation5 + $0x70] sm:$0xff]
    %v76 = vld [vmem:[#allocation5 + $0x78] sm:$0xff]
    %v77 = vld [vmem:[%s2] sm:$0x1]
    %v79 = vlaneseq
    %v80 = vshrl.u32 %v79, 7
    %v81 = vsub.s32 0, %v80
    %v82 = vrot.slane %v77, %v81
    %84 = vmatprep.subr.mxu0 0.0
    %85 = vmatpush1.msra.mxu0 %v61
    %86 = vmatprep.subr.mxu0 0.0
    %87 = vmatpush1.msra.mxu0 %v62
    %88 = vmatprep.subr.mxu0 0.0
    %89 = vmatpush1.msra.mxu0 %v63
    %90 = vmatprep.subr.mxu0 0.0
    %91 = vmatpush1.msra.mxu0 %v64
    %92 = vmatprep.subr.mxu0 0.0
    %93 = vmatpush1.msra.mxu0 %v65
    %94 = vmatprep.subr.mxu0 0.0
    %95 = vmatpush1.msra.mxu0 %v66
    %96 = vmatprep.subr.mxu0 0.0
    %97 = vmatpush1.msra.mxu0 %v67
    %98 = vmatprep.subr.mxu0 0.0
    %99 = vmatpush1.msra.mxu0 %v68
    %100 = vmatprep.subr.mxu0 0.0
    %101 = vmatpush1.msra.mxu0 %v69
    %102 = vmatprep.subr.mxu0 0.0
    %103 = vmatpush1.msra.mxu0 %v70
    %104 = vmatprep.subr.mxu0 0.0
    %105 = vmatpush1.msra.mxu0 %v71
    %106 = vmatprep.subr.mxu0 0.0
    %107 = vmatpush1.msra.mxu0 %v72
    %108 = vmatprep.subr.mxu0 0.0
    %109 = vmatpush1.msra.mxu0 %v73
    %110 = vmatprep.subr.mxu0 0.0
    %111 = vmatpush1.msra.mxu0 %v74
    %112 = vmatprep.subr.mxu0 0.0
    %113 = vmatpush1.msra.mxu0 %v75
    %114 = vmatprep.subr.mxu0 0.0
    %115 = vmatpush1.msra.mxu0 %v76
    %116 = vmatprep.subr.mxu0 0.0
    %117 = vmatpush1.msra.mxu0 0.0
    %118 = vmatprep.subr.mxu0 0.0
    %119 = vmatpush1.msra.mxu0 0.0
    %120 = vmatprep.subr.mxu0 0.0
    %121 = vmatpush1.msra.mxu0 0.0
    %122 = vmatprep.subr.mxu0 0.0
    %123 = vmatpush1.msra.mxu0 0.0
    %124 = vmatprep.subr.mxu0 0.0
    %125 = vmatpush1.msra.mxu0 0.0
    %126 = vmatprep.subr.mxu0 0.0
    %127 = vmatpush1.msra.mxu0 0.0
    %128 = vmatprep.subr.mxu0 0.0
    %129 = vmatpush1.msra.mxu0 0.0
    %130 = vmatprep.subr.mxu0 0.0
    %131 = vmatpush1.msra.mxu0 0.0
    %132 = vmatprep.subr.mxu0 0.0
    %133 = vmatpush1.msra.mxu0 0.0
    %134 = vmatprep.subr.mxu0 0.0
    %135 = vmatpush1.msra.mxu0 0.0
    %136 = vmatprep.subr.mxu0 0.0
    %137 = vmatpush1.msra.mxu0 0.0
    %138 = vmatprep.subr.mxu0 0.0
    %139 = vmatpush1.msra.mxu0 0.0
    %140 = vmatprep.subr.mxu0 0.0
    %141 = vmatpush1.msra.mxu0 0.0
    %142 = vmatprep.subr.mxu0 0.0
    %143 = vmatpush1.msra.mxu0 0.0
    %144 = vmatprep.subr.mxu0 0.0
    %145 = vmatpush1.msra.mxu0 0.0
    %146 = vmatprep.subr.mxu0 0.0
    %147 = vmatpush1.msra.mxu0 0.0
    %148 = vmatprep.mubr.f32.mxu0 0.0
    %149 = vmatmul.mubr.f32.gmra.mrb[0].mxu0 %v60
    %v150 = vpop.f32.mrb[0].mxu0
    %v151 = vadd.f32 %v82, %v150
    %v152 = vpop.f32.mrb[0].mxu0
    %153 = vdwg.mxu0
    %v154 = vmax.f32 %v151, 0.0
    %v155 = vld [vmem:[#allocation7] sm:$0xff]
    %v156 = vld [vmem:[#allocation7 + $0x8] sm:$0xff]
    %v157 = vld [vmem:[#allocation7 + $0x10] sm:$0xff]
    %v158 = vld [vmem:[#allocation7 + $0x18] sm:$0xff]
    %v159 = vld [vmem:[#allocation7 + $0x20] sm:$0xff]
    %v160 = vld [vmem:[#allocation7 + $0x28] sm:$0xff]
    %v161 = vld [vmem:[#allocation7 + $0x30] sm:$0xff]
    %v162 = vld [vmem:[#allocation7 + $0x38] sm:$0xff]
    %v163 = vld [vmem:[#allocation7 + $0x40] sm:$0xff]
    %v164 = vld [vmem:[#allocation7 + $0x48] sm:$0xff]
    %v165 = vld [vmem:[#allocation7 + $0x50] sm:$0xff]
    %v166 = vld [vmem:[#allocation7 + $0x58] sm:$0xff]
    %v167 = vld [vmem:[#allocation7 + $0x60] sm:$0xff]
    %v168 = vld [vmem:[#allocation7 + $0x68] sm:$0xff]
    %v169 = vld [vmem:[#allocation7 + $0x70] sm:$0xff]
    %v170 = vld [vmem:[#allocation7 + $0x78] sm:$0xff]
    %v171 = vld [vmem:[%s4] sm:$0x1]
    %v173 = vlaneseq
    %v174 = vshrl.u32 %v173, 7
    %v175 = vsub.s32 0, %v174
    %v176 = vrot.slane %v171, %v175
    %178 = vmatprep.subr.mxu0 0.0
    %179 = vmatpush1.msra.mxu0 %v155
    %180 = vmatprep.subr.mxu0 0.0
    %181 = vmatpush1.msra.mxu0 %v156
    %182 = vmatprep.subr.mxu0 0.0
    %183 = vmatpush1.msra.mxu0 %v157
    %184 = vmatprep.subr.mxu0 0.0
    %185 = vmatpush1.msra.mxu0 %v158
    %186 = vmatprep.subr.mxu0 0.0
    %187 = vmatpush1.msra.mxu0 %v159
    %188 = vmatprep.subr.mxu0 0.0
    %189 = vmatpush1.msra.mxu0 %v160
    %190 = vmatprep.subr.mxu0 0.0
    %191 = vmatpush1.msra.mxu0 %v161
    %192 = vmatprep.subr.mxu0 0.0
    %193 = vmatpush1.msra.mxu0 %v162
    %194 = vmatprep.subr.mxu0 0.0
    %195 = vmatpush1.msra.mxu0 %v163
    %196 = vmatprep.subr.mxu0 0.0
    %197 = vmatpush1.msra.mxu0 %v164
    %198 = vmatprep.subr.mxu0 0.0
    %199 = vmatpush1.msra.mxu0 %v165
    %200 = vmatprep.subr.mxu0 0.0
    %201 = vmatpush1.msra.mxu0 %v166
    %202 = vmatprep.subr.mxu0 0.0
    %203 = vmatpush1.msra.mxu0 %v167
    %204 = vmatprep.subr.mxu0 0.0
    %205 = vmatpush1.msra.mxu0 %v168
    %206 = vmatprep.subr.mxu0 0.0
    %207 = vmatpush1.msra.mxu0 %v169
    %208 = vmatprep.subr.mxu0 0.0
    %209 = vmatpush1.msra.mxu0 %v170
    %210 = vmatprep.subr.mxu0 0.0
    %211 = vmatpush1.msra.mxu0 0.0
    %212 = vmatprep.subr.mxu0 0.0
    %213 = vmatpush1.msra.mxu0 0.0
    %214 = vmatprep.subr.mxu0 0.0
    %215 = vmatpush1.msra.mxu0 0.0
    %216 = vmatprep.subr.mxu0 0.0
    %217 = vmatpush1.msra.mxu0 0.0
    %218 = vmatprep.subr.mxu0 0.0
    %219 = vmatpush1.msra.mxu0 0.0
    %220 = vmatprep.subr.mxu0 0.0
    %221 = vmatpush1.msra.mxu0 0.0
    %222 = vmatprep.subr.mxu0 0.0
    %223 = vmatpush1.msra.mxu0 0.0
    %224 = vmatprep.subr.mxu0 0.0
    %225 = vmatpush1.msra.mxu0 0.0
    %226 = vmatprep.subr.mxu0 0.0
    %227 = vmatpush1.msra.mxu0 0.0
    %228 = vmatprep.subr.mxu0 0.0
    %229 = vmatpush1.msra.mxu0 0.0
    %230 = vmatprep.subr.mxu0 0.0
    %231 = vmatpush1.msra.mxu0 0.0
    %232 = vmatprep.subr.mxu0 0.0
    %233 = vmatpush1.msra.mxu0 0.0
    %234 = vmatprep.subr.mxu0 0.0
    %235 = vmatpush1.msra.mxu0 0.0
    %236 = vmatprep.subr.mxu0 0.0
    %237 = vmatpush1.msra.mxu0 0.0
    %238 = vmatprep.subr.mxu0 0.0
    %239 = vmatpush1.msra.mxu0 0.0
    %240 = vmatprep.subr.mxu0 0.0
    %241 = vmatpush1.msra.mxu0 0.0
    %242 = vmatprep.mubr.f32.mxu0 0.0
    %243 = vmatmul.mubr.f32.gmra.mrb[0].mxu0 %v154
    %v244 = vpop.f32.mrb[0].mxu0
    %v245 = vadd.f32 %v176, %v244
    %v246 = vpop.f32.mrb[0].mxu0
    %247 = vdwg.mxu0
    %v248 = vmax.f32 %v245, 0.0
    %249 = vst [vmem:[#allocation8] sm:$0xff] %v248
    // Predicated region
    $region34: #{tpu_custom_call.1} parent=1 // pred_check
      _
    $region35: #{tpu_custom_call.1} parent=1 // pred_check_branch
      %251 = sbr.rel (0) target = $region37
    $region36: #{tpu_custom_call.1} parent=1 // pred_region
      %s253 = ssub.s32 128, 128
      %254 = vsyncadd [#allocation4], %s253
      %s256 = sshll.u32 [#allocation8], 4
      %s257 = int_to_ptr.vmem [resolvable:$true] %s256
      %259 = dma.vmem_to_hbm [thread:$0]  %s257, 128, %s5, [#allocation4]
    $region37: #{tpu_custom_call.1} parent=1 // pred_fallthru
      _
    // Predicated region
    $region38: #{tpu_custom_call.1} parent=1 // pred_check
      _
    $region39: #{tpu_custom_call.1} parent=1 // pred_check_branch
      %261 = sbr.rel (0) target = $region41
    $region40: #{tpu_custom_call.1} parent=1 // pred_region
      %262 = dma.done [#allocation4], 128
    $region41: #{tpu_custom_call.1} parent=1 // pred_fallthru
      _
    %263 = vsyncpa [#allocation3], 1
    %264 = vsyncpa [#allocation6], 1
    %265 = vsyncpa [#allocation4], 1

</llo_original>
